<compile_context>
chip_gen: v7x
topology: tpu7x:2x2x1
jax: 0.10.0
libtpu: 0.0.40
codegen_flags: <defaults>
</compile_context>

<pallas_src>
import functools

import jax
import jax.numpy as jnp
from jax.experimental import pallas as pl
from jax.experimental.pallas import tpu as pltpu

# ------------------------------------------------------------------------------
# Module constants (default path: intensity_transform=None, linear_comb=False)
# ------------------------------------------------------------------------------
HU_INTENSITY_INTERVALS = (
    -1000.0, -900.0, -400.0, -100.0, -50.0, -10.0,
    20.0, 40.0, 60.0, 100.0, 800.0, 1000.0,
)
TMP_VAL = -1000.0
N_INTERVALS = len(HU_INTENSITY_INTERVALS) + 1   # = 13 learned class vectors
KP = 16                                          # classes padded to 16 rows/group


# ------------------------------------------------------------------------------
# Pallas kernel
# ------------------------------------------------------------------------------
def _class_vector_kernel(x_ref, repl_ref, w_ref, o_ref):
    """x_ref:    (1, P, TR)       f32 phase-major voxel HU values (lane = row idx)
       repl_ref: (P*KP, P)        bf16 0/1 replication matrix (phase -> KP rows)
       w_ref:    (2*P*Vd, P*KP)   bf16 stacked hi/lo block-diagonal class vectors
       o_ref:    (1, P*Vd, TR)    f32 channel-first output tile
    """
    x = x_ref[0].astype(jnp.float32)                       # (P, TR), lane-dense

    # Bucket each voxel into classes 1..12.  Class 0 is unreachable and values
    # below iv[0] land in class 1, exactly like the torch where-chain (which
    # first maps them to cls[0] == iv[0] and then sweeps them into interval 0).
    # Compares are on exact f32 x, so boundary behavior matches torch.
    idx = jnp.ones_like(x)
    for t in HU_INTENSITY_INTERVALS[1:]:                   # 11 thresholds
        idx = idx + (x >= t).astype(jnp.float32)           # idx in [1, 12]

    # Replicate each phase row over its KP class rows on the MXU.  Exact: idx is
    # a small integer (bf16-exact), repl is 0/1, accumulation is f32.
    idx_exp = jnp.dot(repl_ref[...], idx.astype(jnp.bfloat16),
                      preferred_element_type=jnp.float32)  # (P*KP, TR)

    # Per-row class id pattern (row % KP), generated in-kernel; exact compare.
    krow = jax.lax.broadcasted_iota(jnp.int32, (idx_exp.shape[0], 1), 0) & (KP - 1)
    onehot = jnp.where(idx_exp == krow.astype(jnp.float32), 1.0, 0.0
                       ).astype(jnp.bfloat16)              # (P*KP, TR)

    # Gather the class vectors with one block-diagonal bf16 matmul; the hi and
    # lo bf16 halves of the f32 weights are stacked along M and summed after
    # (~2^-16 relative error; not bit-exact f32).
    res = jnp.dot(w_ref[...], onehot,
                  preferred_element_type=jnp.float32)      # (2*P*Vd, TR)
    half = res.shape[0] // 2
    o_ref[0] = (res[:half] + res[half:]).astype(o_ref.dtype)


# ------------------------------------------------------------------------------
# Block-size policy
# ------------------------------------------------------------------------------
def _round_up(n, m):
    return ((n + m - 1) // m) * m


def _choose_block_rows(n_rows, batch, max_block_rows):
    """Rows per block: multiple of 128 (lane-dense output), as large as the cap
    allows, preferring an exact divisor of n_rows (no pad / no output slice),
    never collapsing to tiny blocks, and keeping >= 2 total grid steps so the
    'parallel' grid can shard across v7x's 2 TensorCores."""
    cap = max(128, (int(max_block_rows) // 128) * 128)
    cap = min(cap, _round_up(n_rows, 128))
    if batch == 1 and n_rows >= 256:
        cap = min(cap, _round_up(-(-n_rows // 2), 128))
    cap = max(cap, 128)

    if n_rows % 128 == 0:
        m = n_rows // 128
        best = 0
        d = 1
        while d * d <= m:
            if m % d == 0:
                for q in (d, m // d):
                    tr = q * 128
                    if tr <= cap:
                        best = max(best, tr)
            d += 1
        if best > 0 and best * 8 >= cap:      # accept unless badly collapsed
            return best, 0

    tr = cap
    pad = (-n_rows) % tr
    return tr, pad


# ------------------------------------------------------------------------------
# Forward pass
# ------------------------------------------------------------------------------
@functools.partial(jax.jit, static_argnames=("patch_size", "max_block_rows"))
def learned_class_vectors_forward(x, vectors, patch_size, max_block_rows=4096):
    B, C, D, H, W = x.shape
    assert C == 1
    assert vectors.shape[0] == N_INTERVALS
    Pd, Ph, Pw = patch_size
    P = Pd * Ph * Pw
    Vd = vectors.shape[1]
    out_ch = P * Vd
    Dp, Hp, Wp = D // Pd, H // Ph, W // Pw
    n_rows = Dp * Hp * Wp                       # output spatial positions / batch

    # .view()-style patchification: flat voxel order grouped P-at-a-time IS the
    # patch layout.  Phase-major (P, n_rows) makes everything in-kernel
    # lane-dense; this transpose is the only wrapper-side HBM pass (~8 B/voxel
    # vs 64 B/voxel of output).
    x_ph = jnp.transpose(x.reshape(B, n_rows, P), (0, 2, 1))   # (B, P, n_rows)

    tr, pad = _choose_block_rows(n_rows, B, max_block_rows)
    n_rows_pad = n_rows + pad
    if pad:   # rare ragged fallback: pads the input, slices the output once
        x_ph = jnp.pad(x_ph, ((0, 0), (0, 0), (0, pad)))

    f32, bf16 = jnp.float32, jnp.bfloat16
    # repl[g*KP + k, g'] = 1{g == g'} : replicate phase g over its KP class rows.
    repl = jnp.kron(jnp.eye(P, dtype=f32), jnp.ones((KP, 1), f32)).astype(bf16)
    # w2[g*Vd + vd, g*KP + k] = vectors[k, vd]  (block-diagonal, k < 13)
    vec_t = jnp.zeros((Vd, KP), f32).at[:, :N_INTERVALS].set(vectors.astype(f32).T)
    w2 = jnp.kron(jnp.eye(P, dtype=f32), vec_t)                  # (P*Vd, P*KP)
    w_hi = w2.astype(bf16)
    w_lo = (w2 - w_hi.astype(f32)).astype(bf16)
    w_stack = jnp.concatenate([w_hi, w_lo], axis=0)              # (2*P*Vd, P*KP)

    grid = (B, n_rows_pad // tr)

    bytes_per_row = (2 * P * 4 + 2 * out_ch * 4      # x / out double buffers
                     + KP * P * 6                    # idx_exp f32 + onehot bf16
                     + 2 * out_ch * 4 + out_ch * 4   # stacked matmul result + sum
                     + 2 * P * 4)                    # small idx intermediates
    vmem_limit = min(96 * 1024 * 1024,
                     2 * tr * bytes_per_row + 4 * 1024 * 1024)

    out = pl.pallas_call(
        _class_vector_kernel,
        out_shape=jax.ShapeDtypeStruct((B, out_ch, n_rows_pad), jnp.float32),
        grid=grid,
        in_specs=[
            pl.BlockSpec((1, P, tr), lambda b, i: (b, 0, i)),
            pl.BlockSpec((P * KP, P), lambda b, i: (0, 0)),
            pl.BlockSpec((2 * out_ch, P * KP), lambda b, i: (0, 0)),
        ],
        out_specs=pl.BlockSpec((1, out_ch, tr), lambda b, i: (b, 0, i)),
        compiler_params=pltpu.CompilerParams(
            dimension_semantics=("parallel", "parallel"),
            vmem_limit_bytes=int(vmem_limit),
        ),
    )(x_ph, repl, w_stack)

    if pad:
        out = out[:, :, :n_rows]
    # Already channel-first: just split the spatial axis (free reshape).
    return out.reshape(B, out_ch, Dp, Hp, Wp)


# ------------------------------------------------------------------------------
# Pure-JAX reference: faithful replica of the torch where-chain + view/permutes.
# ------------------------------------------------------------------------------
def _reference(x, vectors, patch_size):
    B, C, D, H, W = x.shape
    Pd, Ph, Pw = patch_size
    Vd = vectors.shape[1]
    iv = HU_INTENSITY_INTERVALS
    v = x.reshape(-1).astype(jnp.float32)
    code = jnp.where(v < iv[0], 1.0 * TMP_VAL, v)
    for i in range(N_INTERVALS - 2):
        code = jnp.where((code >= iv[i]) & (code < iv[i + 1]),
                         float(i + 2) * TMP_VAL, code)
    code = jnp.where(code >= iv[-1], float(N_INTERVALS) * TMP_VAL, code)
    idx = (code / TMP_VAL).astype(jnp.int32) - 1
    vv = vectors[idx].reshape(B, D, H, W, Vd)
    vv = jnp.transpose(vv, (0, 4, 1, 2, 3))
    p = vv.reshape(B, Vd, D // Pd, H // Ph, W // Pw, Pd, Ph, Pw)
    p = jnp.transpose(p, (0, 2, 3, 4, 5, 6, 7, 1)).reshape(
        B, D // Pd, H // Ph, W // Pw, -1)
    return jnp.transpose(p, (0, 4, 1, 2, 3))


if __name__ == "__main__":
    # Default config: patch_size=(2,2,2), vector_dim=16 -> out_dim = 8*16 = 128.
    patch_size = (2, 2, 2)
    vector_dim = 16
    B, C, D, H, W = 2, 1, 8, 16, 16

    key = jax.random.PRNGKey(0)
    kx, kv = jax.random.split(key)
    vectors = jax.random.normal(kv, (N_INTERVALS, vector_dim), dtype=jnp.float32)
    x = jax.random.uniform(kx, (B, C, D, H, W), dtype=jnp.float32,
                           minval=-1200.0, maxval=1200.0)
    # Include exact interval boundaries and out-of-range values so every class
    # (and the exact-boundary behavior) is exercised.
    specials = jnp.array(HU_INTENSITY_INTERVALS + (-1500.0, 0.0, 1500.0),
                         dtype=jnp.float32)
    x = x.at[0, 0, 0, 0, :specials.shape[0]].set(specials)

    # max_block_rows=128 forces a (2, 2) grid at this small size (pipeline test).
    out = learned_class_vectors_forward(x, vectors, patch_size, max_block_rows=128)
    out = jax.block_until_ready(out)

    ref = _reference(x, vectors, patch_size)
    assert out.shape == (B, 128, D // 2, H // 2, W // 2), out.shape
    assert jnp.allclose(out, ref, atol=1e-4, rtol=1e-4), \
        float(jnp.max(jnp.abs(out - ref)))

    print("KERNEL_OK")
</pallas_src>

<mosaic_0001>
module attributes {stable_mosaic.version = 11 : i64} {
  func.func @_class_vector_kernel(%arg0: i32, %arg1: i32, %arg2: memref<1x8x128xf32, #tpu.memory_space<vmem>>, %arg3: memref<128x8xbf16, #tpu.memory_space<vmem>>, %arg4: memref<256x128xbf16, #tpu.memory_space<vmem>>, %arg5: memref<1x128x128xf32, #tpu.memory_space<vmem>>) attributes {dimension_semantics = [#tpu.dimension_semantics<parallel>, #tpu.dimension_semantics<parallel>], iteration_bounds = array<i64: 2, 2>, scalar_prefetch = 0 : i64, scratch_operands = 0 : i64, tpu.core_type = #tpu.core_type<tc>, window_params = [{transform_indices = @transform_0, window_bounds = array<i64: 1, 8, 128>}, {pipeline_mode = #tpu.pipeline_mode<synchronous>, transform_indices = @transform_1, window_bounds = array<i64: 128, 8>}, {pipeline_mode = #tpu.pipeline_mode<synchronous>, transform_indices = @transform_2, window_bounds = array<i64: 256, 128>}, {transform_indices = @transform_3, window_bounds = array<i64: 1, 128, 128>}]} {
    %c0 = arith.constant 0 : index
    %c0_0 = arith.constant 0 : index
    %c0_1 = arith.constant 0 : index
    %0 = vector.load %arg2[%c0, %c0_0, %c0_1] : memref<1x8x128xf32, #tpu.memory_space<vmem>>, vector<1x8x128xf32>
    %1 = vector.shape_cast %0 : vector<1x8x128xf32> to vector<8x128xf32>
    %cst = arith.constant 1.000000e+00 : f32
    %2 = vector.broadcast %cst : f32 to vector<8x128xf32>
    %cst_2 = arith.constant -9.000000e+02 : f32
    %3 = vector.broadcast %cst_2 : f32 to vector<8x128xf32>
    %4 = arith.cmpf oge, %1, %3 : vector<8x128xf32>
    %5 = arith.extui %4 : vector<8x128xi1> to vector<8x128xi32>
    %6 = arith.sitofp %5 : vector<8x128xi32> to vector<8x128xf32>
    %7 = arith.addf %2, %6 : vector<8x128xf32>
    %cst_3 = arith.constant -4.000000e+02 : f32
    %8 = vector.broadcast %cst_3 : f32 to vector<8x128xf32>
    %9 = arith.cmpf oge, %1, %8 : vector<8x128xf32>
    %10 = arith.extui %9 : vector<8x128xi1> to vector<8x128xi32>
    %11 = arith.sitofp %10 : vector<8x128xi32> to vector<8x128xf32>
    %12 = arith.addf %7, %11 : vector<8x128xf32>
    %cst_4 = arith.constant -1.000000e+02 : f32
    %13 = vector.broadcast %cst_4 : f32 to vector<8x128xf32>
    %14 = arith.cmpf oge, %1, %13 : vector<8x128xf32>
    %15 = arith.extui %14 : vector<8x128xi1> to vector<8x128xi32>
    %16 = arith.sitofp %15 : vector<8x128xi32> to vector<8x128xf32>
    %17 = arith.addf %12, %16 : vector<8x128xf32>
    %cst_5 = arith.constant -5.000000e+01 : f32
    %18 = vector.broadcast %cst_5 : f32 to vector<8x128xf32>
    %19 = arith.cmpf oge, %1, %18 : vector<8x128xf32>
    %20 = arith.extui %19 : vector<8x128xi1> to vector<8x128xi32>
    %21 = arith.sitofp %20 : vector<8x128xi32> to vector<8x128xf32>
    %22 = arith.addf %17, %21 : vector<8x128xf32>
    %cst_6 = arith.constant -1.000000e+01 : f32
    %23 = vector.broadcast %cst_6 : f32 to vector<8x128xf32>
    %24 = arith.cmpf oge, %1, %23 : vector<8x128xf32>
    %25 = arith.extui %24 : vector<8x128xi1> to vector<8x128xi32>
    %26 = arith.sitofp %25 : vector<8x128xi32> to vector<8x128xf32>
    %27 = arith.addf %22, %26 : vector<8x128xf32>
    %cst_7 = arith.constant 2.000000e+01 : f32
    %28 = vector.broadcast %cst_7 : f32 to vector<8x128xf32>
    %29 = arith.cmpf oge, %1, %28 : vector<8x128xf32>
    %30 = arith.extui %29 : vector<8x128xi1> to vector<8x128xi32>
    %31 = arith.sitofp %30 : vector<8x128xi32> to vector<8x128xf32>
    %32 = arith.addf %27, %31 : vector<8x128xf32>
    %cst_8 = arith.constant 4.000000e+01 : f32
    %33 = vector.broadcast %cst_8 : f32 to vector<8x128xf32>
    %34 = arith.cmpf oge, %1, %33 : vector<8x128xf32>
    %35 = arith.extui %34 : vector<8x128xi1> to vector<8x128xi32>
    %36 = arith.sitofp %35 : vector<8x128xi32> to vector<8x128xf32>
    %37 = arith.addf %32, %36 : vector<8x128xf32>
    %cst_9 = arith.constant 6.000000e+01 : f32
    %38 = vector.broadcast %cst_9 : f32 to vector<8x128xf32>
    %39 = arith.cmpf oge, %1, %38 : vector<8x128xf32>
    %40 = arith.extui %39 : vector<8x128xi1> to vector<8x128xi32>
    %41 = arith.sitofp %40 : vector<8x128xi32> to vector<8x128xf32>
    %42 = arith.addf %37, %41 : vector<8x128xf32>
    %cst_10 = arith.constant 1.000000e+02 : f32
    %43 = vector.broadcast %cst_10 : f32 to vector<8x128xf32>
    %44 = arith.cmpf oge, %1, %43 : vector<8x128xf32>
    %45 = arith.extui %44 : vector<8x128xi1> to vector<8x128xi32>
    %46 = arith.sitofp %45 : vector<8x128xi32> to vector<8x128xf32>
    %47 = arith.addf %42, %46 : vector<8x128xf32>
    %cst_11 = arith.constant 8.000000e+02 : f32
    %48 = vector.broadcast %cst_11 : f32 to vector<8x128xf32>
    %49 = arith.cmpf oge, %1, %48 : vector<8x128xf32>
    %50 = arith.extui %49 : vector<8x128xi1> to vector<8x128xi32>
    %51 = arith.sitofp %50 : vector<8x128xi32> to vector<8x128xf32>
    %52 = arith.addf %47, %51 : vector<8x128xf32>
    %cst_12 = arith.constant 1.000000e+03 : f32
    %53 = vector.broadcast %cst_12 : f32 to vector<8x128xf32>
    %54 = arith.cmpf oge, %1, %53 : vector<8x128xf32>
    %55 = arith.extui %54 : vector<8x128xi1> to vector<8x128xi32>
    %56 = arith.sitofp %55 : vector<8x128xi32> to vector<8x128xf32>
    %57 = arith.addf %52, %56 : vector<8x128xf32>
    %c0_13 = arith.constant 0 : index
    %c0_14 = arith.constant 0 : index
    %58 = vector.load %arg3[%c0_13, %c0_14] : memref<128x8xbf16, #tpu.memory_space<vmem>>, vector<128x8xbf16>
    %59 = arith.truncf %57 : vector<8x128xf32> to vector<8x128xbf16>
    %cst_15 = arith.constant dense<0.000000e+00> : vector<128x128xf32>
    %60 = tpu.matmul %58, %59, %cst_15 {dimension_numbers = #tpu.dot_dimension_numbers<[1], [0], [0], [1], [0, 0, 1, 1], [], []>} : vector<128x8xbf16>, vector<8x128xbf16>, vector<128x128xf32> -> vector<128x128xf32>
    %61 = tpu.iota {dimensions = array<i32: 0>} : vector<128x1xi32>
    %c15_i32 = arith.constant 15 : i32
    %62 = vector.broadcast %c15_i32 : i32 to vector<128x1xi32>
    %63 = arith.andi %61, %62 : vector<128x1xi32>
    %64 = arith.sitofp %63 : vector<128x1xi32> to vector<128x1xf32>
    %65 = vector.broadcast %64 : vector<128x1xf32> to vector<128x128xf32>
    %66 = arith.cmpf oeq, %60, %65 : vector<128x128xf32>
    %cst_16 = arith.constant 1.000000e+00 : f32
    %cst_17 = arith.constant 0.000000e+00 : f32
    %67 = vector.broadcast %cst_16 : f32 to vector<128x128xf32>
    %68 = vector.broadcast %cst_17 : f32 to vector<128x128xf32>
    %69 = arith.select %66, %67, %68 : vector<128x128xi1>, vector<128x128xf32>
    %70 = arith.truncf %69 : vector<128x128xf32> to vector<128x128xbf16>
    %c0_18 = arith.constant 0 : index
    %c0_19 = arith.constant 0 : index
    %71 = vector.load %arg4[%c0_18, %c0_19] : memref<256x128xbf16, #tpu.memory_space<vmem>>, vector<256x128xbf16>
    %cst_20 = arith.constant dense<0.000000e+00> : vector<256x128xf32>
    %72 = tpu.matmul %71, %70, %cst_20 {dimension_numbers = #tpu.dot_dimension_numbers<[1], [0], [0], [1], [0, 0, 1, 1], [], []>} : vector<256x128xbf16>, vector<128x128xbf16>, vector<256x128xf32> -> vector<256x128xf32>
    %73 = vector.extract_strided_slice %72 {offsets = [0, 0], sizes = [128, 128], strides = [1, 1]} : vector<256x128xf32> to vector<128x128xf32>
    %74 = vector.extract_strided_slice %72 {offsets = [128, 0], sizes = [128, 128], strides = [1, 1]} : vector<256x128xf32> to vector<128x128xf32>
    %75 = arith.addf %73, %74 : vector<128x128xf32>
    %c0_21 = arith.constant 0 : index
    %c0_22 = arith.constant 0 : index
    %c0_23 = arith.constant 0 : index
    %76 = vector.load %arg5[%c0_21, %c0_22, %c0_23] : memref<1x128x128xf32, #tpu.memory_space<vmem>>, vector<1x128x128xf32>
    %77 = vector.shape_cast %76 : vector<1x128x128xf32> to vector<128x128xf32>
    %78 = vector.shape_cast %75 : vector<128x128xf32> to vector<1x128x128xf32>
    tpu.vector_store %arg5[%c0_21, %c0_22, %c0_23], %78 {strides = array<i32>} : memref<1x128x128xf32, #tpu.memory_space<vmem>>, vector<1x128x128xf32>,
    return
  }
  func.func @transform_0(%arg0: i32, %arg1: i32) -> (i32, i32, i32) {
    %c0_i32 = arith.constant 0 : i32
    %c0_i32_0 = arith.constant 0 : i32
    return %arg0, %c0_i32, %arg1 : i32, i32, i32
  }
  func.func @transform_1(%arg0: i32, %arg1: i32) -> (i32, i32) {
    %c0_i32 = arith.constant 0 : i32
    %c0_i32_0 = arith.constant 0 : i32
    %c0_i32_1 = arith.constant 0 : i32
    return %c0_i32, %c0_i32_0 : i32, i32
  }
  func.func @transform_2(%arg0: i32, %arg1: i32) -> (i32, i32) {
    %c0_i32 = arith.constant 0 : i32
    %c0_i32_0 = arith.constant 0 : i32
    %c0_i32_1 = arith.constant 0 : i32
    return %c0_i32, %c0_i32_0 : i32, i32
  }
  func.func @transform_3(%arg0: i32, %arg1: i32) -> (i32, i32, i32) {
    %c0_i32 = arith.constant 0 : i32
    %c0_i32_0 = arith.constant 0 : i32
    return %arg0, %c0_i32, %arg1 : i32, i32, i32
  }
}

</mosaic_0001>

<llo_original>
// kernel: learned_class_vectors_forward.1
$region0: #{learned_class_vectors_forward.1}
  #allocation0 [shape = 'u32[]', space=smem, size = 0x4, offset = 0x4, fixed_abs, tag = 'smem constant byte address 0x4 - core index']
  #allocation1 [shape = 'u32[144,128]{1,0:T(1,128)}', space=vmem, size = 0x12000, scoped, tag = 'internal scratch']
  %s0 = inlined_call_operand.vmem [shape: f32[2,8,256], index: 0, kind: input, shape index: {}]
  %s1 = inlined_call_operand.vmem [shape: bf16[128,8], index: 1, kind: input, shape index: {}]
  %s2 = inlined_call_operand.vmem [shape: bf16[256,128], index: 2, kind: input, shape index: {}]
  %s3 = inlined_call_operand.vmem [shape: f32[2,128,256], index: 3, kind: output, shape index: {}]
  %s4 = sld [smem:[#allocation0]]
  $region79: #{learned_class_vectors_forward.1} parent=0
    _
  %s6 = ssub.s32 1, %s4
  %s7 = scalar_select 0, %s6, %s4
  $region1: #{learned_class_vectors_forward.1} parent=0
    #allocation2 [shape = 'u8[131072]{0}', space=vmem, size = 0x20000, scoped, tag = 'output window, operand 0']
    loop: start=0, step=1, limit=6
    $region2: #{learned_class_vectors_forward.1} parent=1 // loop_pre_header
      _
    $region3: #{learned_class_vectors_forward.1} parent=1 // loop_header
      %s9 = sphi 0, %s13
      %p10 = scmp.ge.s32.totalorder %s9, 6
      %s16 = sphi 0, %s28
      %s17 = sphi 0, %s24
      %s18 = sphi 0, %s16
      %s19 = sphi 0, %s17
      %s20 = sphi 0, %s18
      %s21 = sphi 0, %s19
      %s33 = sphi 0, %s35
      %s36 = sphi 0, %s33
      %s37 = sphi 0, %s36
      %s53 = sphi 0, %s37
      %s57 = sphi 0, %s57
      %s59 = sphi 0, %s57
      %s60 = sphi 0, %s59
      %s74 = sphi 0, %s60
      %s78 = sphi 0, %s78
      %s80 = sphi 0, %s78
      %s81 = sphi 0, %s80
      %s95 = sphi 0, %s81
      %s103 = sphi 0, %s105
      %s106 = sphi 0, %s103
      %s107 = sphi 0, %s106
      %s123 = sphi 0, %s107
    $region4: #{learned_class_vectors_forward.1} parent=1 // loop_header_branch
      %12 = sbr.rel (%p10) target = $region8
    $region5: #{learned_class_vectors_forward.1} parent=1 // loop_body
      %s14 = ssub.s32 %s9, 1
      %s15 = ssub.s32 %s9, 2
      %s22 = sadd.s32 1, %s17
      %p23 = scmp.ge.s32.totalorder %s22, 2
      %s24 = scalar_select %p23, 0, %s22
      %s25 = sadd.s32 1, %s16
      %s26 = scalar_select %p23, %s25, %s16
      %p27 = scmp.ge.s32.totalorder %s26, 2
      %s28 = scalar_select %p27, 0, %s26
      %s29 = ssub.s32 %s16, %s28
      %s30 = ssub.s32 %s17, %s24
      %s31 = sor.u32 %s29, %s30
      %p32 = scmp.eq.s32.totalorder %s31, 0
      %s34 = sadd.s32 %s33, 1
      %s35 = scalar_select %p32, %s33, %s34
      %p38 = pneg %p32
      %p39 = scmp.eq.s32.totalorder %s9, 3
      %p40 = por %p38, %p39
      %p41 = scmp.ne.s32.totalorder %s33, %s36
      %p42 = scmp.eq.s32.totalorder %s9, 0
      %p43 = por %p41, %p42
      %p44 = scmp.ne.s32.totalorder %s33, %s36
      %p45 = scmp.eq.s32.totalorder %s14, 3
      %p46 = por %p44, %p45
      %p47 = scmp.ne.s32.totalorder %s36, %s37
      %p48 = scmp.eq.s32.totalorder %s14, 0
      %p49 = por %p47, %p48
      %p50 = scmp.ne.s32.totalorder %s36, %s37
      %p51 = scmp.eq.s32.totalorder %s15, 3
      %p52 = por %p50, %p51
      %p54 = scmp.ne.s32.totalorder %s37, %s53
      %p55 = scmp.eq.s32.totalorder %s15, 0
      %p56 = por %p54, %p55
      %s58 = sadd.s32 %s57, 1
      %p61 = scmp.eq.s32.totalorder %s9, 3
      %p62 = scmp.ne.s32.totalorder %s57, %s59
      %p63 = scmp.eq.s32.totalorder %s9, 0
      %p64 = por %p62, %p63
      %p65 = scmp.ne.s32.totalorder %s57, %s59
      %p66 = scmp.eq.s32.totalorder %s14, 3
      %p67 = por %p65, %p66
      %p68 = scmp.ne.s32.totalorder %s59, %s60
      %p69 = scmp.eq.s32.totalorder %s14, 0
      %p70 = por %p68, %p69
      %p71 = scmp.ne.s32.totalorder %s59, %s60
      %p72 = scmp.eq.s32.totalorder %s15, 3
      %p73 = por %p71, %p72
      %p75 = scmp.ne.s32.totalorder %s60, %s74
      %p76 = scmp.eq.s32.totalorder %s15, 0
      %p77 = por %p75, %p76
      %s79 = sadd.s32 %s78, 1
      %p82 = scmp.eq.s32.totalorder %s9, 3
      %p83 = scmp.ne.s32.totalorder %s78, %s80
      %p84 = scmp.eq.s32.totalorder %s9, 0
      %p85 = por %p83, %p84
      %p86 = scmp.ne.s32.totalorder %s78, %s80
      %p87 = scmp.eq.s32.totalorder %s14, 3
      %p88 = por %p86, %p87
      %p89 = scmp.ne.s32.totalorder %s80, %s81
      %p90 = scmp.eq.s32.totalorder %s14, 0
      %p91 = por %p89, %p90
      %p92 = scmp.ne.s32.totalorder %s80, %s81
      %p93 = scmp.eq.s32.totalorder %s15, 3
      %p94 = por %p92, %p93
      %p96 = scmp.ne.s32.totalorder %s81, %s95
      %p97 = scmp.eq.s32.totalorder %s15, 0
      %p98 = por %p96, %p97
      %s99 = ssub.s32 %s16, %s28
      %s100 = ssub.s32 %s17, %s24
      %s101 = sor.u32 %s99, %s100
      %p102 = scmp.eq.s32.totalorder %s101, 0
      %s104 = sadd.s32 %s103, 1
      %s105 = scalar_select %p102, %s103, %s104
      %p108 = pneg %p102
      %p109 = scmp.eq.s32.totalorder %s9, 3
      %p110 = por %p108, %p109
      %p111 = scmp.ne.s32.totalorder %s103, %s106
      %p112 = scmp.eq.s32.totalorder %s9, 0
      %p113 = por %p111, %p112
      %p114 = scmp.ne.s32.totalorder %s103, %s106
      %p115 = scmp.eq.s32.totalorder %s14, 3
      %p116 = por %p114, %p115
      %p117 = scmp.ne.s32.totalorder %s106, %s107
      %p118 = scmp.eq.s32.totalorder %s14, 0
      %p119 = por %p117, %p118
      %p120 = scmp.ne.s32.totalorder %s106, %s107
      %p121 = scmp.eq.s32.totalorder %s15, 3
      %p122 = por %p120, %p121
      %p124 = scmp.ne.s32.totalorder %s107, %s123
      %p125 = scmp.eq.s32.totalorder %s15, 0
      %p126 = por %p124, %p125
      %p127 = scmp.le.s32.totalorder 1, %s9
      %p128 = scmp.lt.s32.totalorder %s9, 5
      %p129 = pnand %p127, %p128
      %p130 = pneg %p129
      // Predicated region
      $region9: #{learned_class_vectors_forward.1} parent=5 // pred_check
        _
      $region10: #{learned_class_vectors_forward.1} parent=5 // pred_check_branch
        %132 = sbr.rel (%p129) target = $region12
      $region11: #{learned_class_vectors_forward.1} parent=5 // pred_region
        %s133 = ssub.s32 %s9, 1
        // Predicated region
        $region13: #{learned_class_vectors_forward.1} parent=11 // pred_check
          %p134 = pneg %p70
        $region14: #{learned_class_vectors_forward.1} parent=11 // pred_check_branch
          %136 = sbr.rel (%p134) target = $region16
        $region15: #{learned_class_vectors_forward.1} parent=11 // pred_region
          _
        $region16: #{learned_class_vectors_forward.1} parent=11 // pred_fallthru
          _
        // Predicated region
        $region17: #{learned_class_vectors_forward.1} parent=11 // pred_check
          %p137 = pneg %p91
        $region18: #{learned_class_vectors_forward.1} parent=11 // pred_check_branch
          %139 = sbr.rel (%p137) target = $region20
        $region19: #{learned_class_vectors_forward.1} parent=11 // pred_region
          _
        $region20: #{learned_class_vectors_forward.1} parent=11 // pred_fallthru
          _
      $region12: #{learned_class_vectors_forward.1} parent=5 // pred_fallthru
        _
      %p140 = scmp.lt.s32.totalorder %s9, 4
      // Predicated region
      $region21: #{learned_class_vectors_forward.1} parent=5 // pred_check
        %p141 = pneg %p140
      $region22: #{learned_class_vectors_forward.1} parent=5 // pred_check_branch
        %143 = sbr.rel (%p141) target = $region24
      $region23: #{learned_class_vectors_forward.1} parent=5 // pred_region
        // Predicated region
        $region25: #{learned_class_vectors_forward.1} parent=23 // pred_check
          %p144 = pneg %p43
        $region26: #{learned_class_vectors_forward.1} parent=23 // pred_check_branch
          %146 = sbr.rel (%p144) target = $region28
        $region27: #{learned_class_vectors_forward.1} parent=23 // pred_region
          %p147 = scmp.lt.s32.totalorder %s16, 1
          %s148 = scalar_select %p147, %s16, 1
          %p149 = scmp.lt.s32.totalorder %s17, 1
          %s150 = scalar_select %p149, %s17, 1
          %s151 = smul.addr %s148, 2
          %s152 = sadd.s32 %s150, %s151
          %s153 = smul.addr %s152, 8
          %s154 = scalar_lea.vmem %s0, %s153
        $region28: #{learned_class_vectors_forward.1} parent=23 // pred_fallthru
          _
      $region24: #{learned_class_vectors_forward.1} parent=5 // pred_fallthru
        _
      %p155 = scmp.le.s32.totalorder 1, %s9
      %p156 = scmp.lt.s32.totalorder %s9, 5
      %p157 = pnand %p155, %p156
      %p158 = pneg %p157
      // Predicated region
      $region29: #{learned_class_vectors_forward.1} parent=5 // pred_check
        _
      $region30: #{learned_class_vectors_forward.1} parent=5 // pred_check_branch
        %160 = sbr.rel (%p157) target = $region32
      $region31: #{learned_class_vectors_forward.1} parent=5 // pred_region
        %s161 = ssub.s32 %s9, 1
        %p162 = scmp.lt.s32.totalorder %s18, 1
        %s163 = scalar_select %p162, %s18, 1
        %p164 = scmp.lt.s32.totalorder %s19, 1
        %s165 = scalar_select %p164, %s19, 1
        %s166 = smul.addr %s163, 2
        %s167 = sadd.s32 %s165, %s166
        %s168 = smul.addr %s167, 8
        %s169 = scalar_lea.vmem %s0, %s168
        %p170 = pneg %p49
        %p171 = pneg %p46
        %p172 = pneg %p70
        %p173 = pneg %p67
        %p174 = pneg %p91
        %p175 = pneg %p88
        %p176 = pneg %p119
        %p177 = pneg %p116
        %s178 = sand.u32 %s106, 1
        %s179 = sand.u32 %s106, 1
        %s180 = smul.addr %s179, 128
        %s181 = scalar_lea.vmem [#allocation2], %s180
        %p182 = scmp.lt.s32.totalorder %s18, 1
        %s183 = scalar_select %p182, %s18, 1
        %p184 = scmp.lt.s32.totalorder %s19, 1
        %s185 = scalar_select %p184, %s19, 1
        %s186 = smul.addr %s183, 2
        %s187 = sadd.s32 %s185, %s186
        %s188 = smul.addr %s187, 8
        %s189 = scalar_lea.vmem %s0, %s188
        %v191 = vld [vmem:[%s189] sm:$0xff]
        %vm192 = vcmp.ge.f32.partialorder %v191, -900.0
        %v193 = vsel %vm192, 1, 0
        %v194 = vcvt.s32.f32 %v193
        %v195 = vadd.f32 %v194, 1.0
        %vm196 = vcmp.ge.f32.partialorder %v191, -400.0
        %v197 = vsel %vm196, 1, 0
        %v198 = vcvt.s32.f32 %v197
        %v199 = vadd.f32 %v195, %v198
        %vm200 = vcmp.ge.f32.partialorder %v191, -100.0
        %v201 = vsel %vm200, 1, 0
        %v202 = vcvt.s32.f32 %v201
        %v203 = vadd.f32 %v199, %v202
        %vm204 = vcmp.ge.f32.partialorder %v191, -50.0
        %v205 = vsel %vm204, 1, 0
        %v206 = vcvt.s32.f32 %v205
        %v207 = vadd.f32 %v203, %v206
        %vm208 = vcmp.ge.f32.partialorder %v191, -10.0
        %v209 = vsel %vm208, 1, 0
        %v210 = vcvt.s32.f32 %v209
        %v211 = vadd.f32 %v207, %v210
        %vm212 = vcmp.ge.f32.partialorder %v191, 20.0
        %v213 = vsel %vm212, 1, 0
        %v214 = vcvt.s32.f32 %v213
        %v215 = vadd.f32 %v211, %v214
        %vm216 = vcmp.ge.f32.partialorder %v191, 40.0
        %v217 = vsel %vm216, 1, 0
        %v218 = vcvt.s32.f32 %v217
        %v219 = vadd.f32 %v215, %v218
        %vm220 = vcmp.ge.f32.partialorder %v191, 60.0
        %v221 = vsel %vm220, 1, 0
        %v222 = vcvt.s32.f32 %v221
        %v223 = vadd.f32 %v219, %v222
        %vm224 = vcmp.ge.f32.partialorder %v191, 100.0
        %v225 = vsel %vm224, 1, 0
        %v226 = vcvt.s32.f32 %v225
        %v227 = vadd.f32 %v223, %v226
        %vm228 = vcmp.ge.f32.partialorder %v191, 800.0
        %v229 = vsel %vm228, 1, 0
        %v230 = vcvt.s32.f32 %v229
        %v231 = vadd.f32 %v227, %v230
        %vm232 = vcmp.ge.f32.partialorder %v191, 1000.0
        %v233 = vsel %vm232, 1, 0
        %v234 = vcvt.s32.f32 %v233
        %v235 = vadd.f32 %v231, %v234
        %v236 = vld [vmem:[%s1] sm:$0xf]
        %v237 = vld [vmem:[%s1 + $0x4] sm:$0xf]
        %v238 = vld [vmem:[%s1 + $0x8] sm:$0xf]
        %v239 = vld [vmem:[%s1 + $0xc] sm:$0xf]
        %v240 = vld [vmem:[%s1 + $0x10] sm:$0xf]
        %v241 = vld [vmem:[%s1 + $0x14] sm:$0xf]
        %v242 = vld [vmem:[%s1 + $0x18] sm:$0xf]
        %v243 = vld [vmem:[%s1 + $0x1c] sm:$0xf]
        %v244 = vld [vmem:[%s1 + $0x20] sm:$0xf]
        %v245 = vld [vmem:[%s1 + $0x24] sm:$0xf]
        %v246 = vld [vmem:[%s1 + $0x28] sm:$0xf]
        %v247 = vld [vmem:[%s1 + $0x2c] sm:$0xf]
        %v248 = vld [vmem:[%s1 + $0x30] sm:$0xf]
        %v249 = vld [vmem:[%s1 + $0x34] sm:$0xf]
        %v250 = vld [vmem:[%s1 + $0x38] sm:$0xf]
        %v251 = vld [vmem:[%s1 + $0x3c] sm:$0xf]
        %v252 = vpack.c.bf16 %v235, %v235
        %v269 = vunpack.c.l.b16 %v236
        %v270 = vunpack.c.l.b16 %v237
        %v271 = vunpack.c.l.b16 %v238
        %v272 = vunpack.c.l.b16 %v239
        %v273 = vunpack.c.l.b16 %v240
        %v274 = vunpack.c.l.b16 %v241
        %v275 = vunpack.c.l.b16 %v242
        %v276 = vunpack.c.l.b16 %v243
        %v277 = vunpack.c.l.b16 %v244
        %v278 = vunpack.c.l.b16 %v245
        %v279 = vunpack.c.l.b16 %v246
        %v280 = vunpack.c.l.b16 %v247
        %v281 = vunpack.c.l.b16 %v248
        %v282 = vunpack.c.l.b16 %v249
        %v283 = vunpack.c.l.b16 %v250
        %v284 = vunpack.c.l.b16 %v251
        %v285 = vpack.c.b16 %v270, %v269
        %v286 = vpack.c.b16 %v272, %v271
        %v287 = vpack.c.b16 %v274, %v273
        %v288 = vpack.c.b16 %v276, %v275
        %v289 = vpack.c.b16 %v278, %v277
        %v290 = vpack.c.b16 %v280, %v279
        %v291 = vpack.c.b16 %v282, %v281
        %v292 = vpack.c.b16 %v284, %v283
        %vm293 = vcmask 64512
        %v295 = vsel %vm293, %v285, 0
        %v298 = vsel %vm293, %v286, 0
        %v301 = vsel %vm293, %v287, 0
        %v304 = vsel %vm293, %v288, 0
        %v307 = vsel %vm293, %v289, 0
        %v310 = vsel %vm293, %v290, 0
        %v313 = vsel %vm293, %v291, 0
        %v316 = vsel %vm293, %v292, 0
        %vm318 = vcmask 1043456
        %v320 = vsel %vm318, %v252, 0
        %322 = vmatprep.subr.bf16.mxu0 0
        %323 = vmatpush1.bf16.msra.mxu0 %v320
        %324 = vmatprep.subr.bf16.mxu0 0
        %325 = vmatpush1.bf16.msra.mxu0 0
        %326 = vmatprep.subr.bf16.mxu0 0
        %327 = vmatpush1.bf16.msra.mxu0 0
        %328 = vmatprep.subr.bf16.mxu0 0
        %329 = vmatpush1.bf16.msra.mxu0 0
        %330 = vmatprep.subr.bf16.mxu0 0
        %331 = vmatpush1.bf16.msra.mxu0 0
        %332 = vmatprep.subr.bf16.mxu0 0
        %333 = vmatpush1.bf16.msra.mxu0 0
        %334 = vmatprep.subr.bf16.mxu0 0
        %335 = vmatpush1.bf16.msra.mxu0 0
        %336 = vmatprep.subr.bf16.mxu0 0
        %337 = vmatpush1.bf16.msra.mxu0 0
        %338 = vmatprep.subr.bf16.mxu0 0
        %339 = vmatpush1.bf16.msra.mxu0 0
        %340 = vmatprep.subr.bf16.mxu0 0
        %341 = vmatpush1.bf16.msra.mxu0 0
        %342 = vmatprep.subr.bf16.mxu0 0
        %343 = vmatpush1.bf16.msra.mxu0 0
        %344 = vmatprep.subr.bf16.mxu0 0
        %345 = vmatpush1.bf16.msra.mxu0 0
        %346 = vmatprep.subr.bf16.mxu0 0
        %347 = vmatpush1.bf16.msra.mxu0 0
        %348 = vmatprep.subr.bf16.mxu0 0
        %349 = vmatpush1.bf16.msra.mxu0 0
        %350 = vmatprep.subr.bf16.mxu0 0
        %351 = vmatpush1.bf16.msra.mxu0 0
        %352 = vmatprep.subr.bf16.mxu0 0
        %353 = vmatpush1.bf16.msra.mxu0 0
        %354 = vmatprep.mubr.bf16.mxu0 0
        %355 = vmatmul.mubr.bf16.gmra.mrb[0].mxu0 %v295
        %v356 = vpop.f32.mrb[0].mxu0
        %v357 = vadd.f32 0.0, %v356
        %v358 = vpop.f32.mrb[0].mxu0
        %v359 = vpop.f32.mrb[0].mxu0
        %v360 = vadd.f32 0.0, %v359
        %v361 = vpop.f32.mrb[0].mxu0
        %362 = vmatprep.mubr.bf16.mxu0 0
        %363 = vmatmul.mubr.bf16.gmra.mrb[0].mxu0 %v298
        %v364 = vpop.f32.mrb[0].mxu0
        %v365 = vadd.f32 0.0, %v364
        %v366 = vpop.f32.mrb[0].mxu0
        %v367 = vpop.f32.mrb[0].mxu0
        %v368 = vadd.f32 0.0, %v367
        %v369 = vpop.f32.mrb[0].mxu0
        %370 = vmatprep.mubr.bf16.mxu0 0
        %371 = vmatmul.mubr.bf16.gmra.mrb[0].mxu0 %v301
        %v372 = vpop.f32.mrb[0].mxu0
        %v373 = vadd.f32 0.0, %v372
        %v374 = vpop.f32.mrb[0].mxu0
        %v375 = vpop.f32.mrb[0].mxu0
        %v376 = vadd.f32 0.0, %v375
        %v377 = vpop.f32.mrb[0].mxu0
        %378 = vmatprep.mubr.bf16.mxu0 0
        %379 = vmatmul.mubr.bf16.gmra.mrb[0].mxu0 %v304
        %v380 = vpop.f32.mrb[0].mxu0
        %v381 = vadd.f32 0.0, %v380
        %v382 = vpop.f32.mrb[0].mxu0
        %v383 = vpop.f32.mrb[0].mxu0
        %v384 = vadd.f32 0.0, %v383
        %v385 = vpop.f32.mrb[0].mxu0
        %386 = vmatprep.mubr.bf16.mxu0 0
        %387 = vmatmul.mubr.bf16.gmra.mrb[0].mxu0 %v307
        %v388 = vpop.f32.mrb[0].mxu0
        %v389 = vadd.f32 0.0, %v388
        %v390 = vpop.f32.mrb[0].mxu0
        %v391 = vpop.f32.mrb[0].mxu0
        %v392 = vadd.f32 0.0, %v391
        %v393 = vpop.f32.mrb[0].mxu0
        %394 = vmatprep.mubr.bf16.mxu0 0
        %395 = vmatmul.mubr.bf16.gmra.mrb[0].mxu0 %v310
        %v396 = vpop.f32.mrb[0].mxu0
        %v397 = vadd.f32 0.0, %v396
        %v398 = vpop.f32.mrb[0].mxu0
        %v399 = vpop.f32.mrb[0].mxu0
        %v400 = vadd.f32 0.0, %v399
        %v401 = vpop.f32.mrb[0].mxu0
        %402 = vmatprep.mubr.bf16.mxu0 0
        %403 = vmatmul.mubr.bf16.gmra.mrb[0].mxu0 %v313
        %v404 = vpop.f32.mrb[0].mxu0
        %v405 = vadd.f32 0.0, %v404
        %v406 = vpop.f32.mrb[0].mxu0
        %v407 = vpop.f32.mrb[0].mxu0
        %v408 = vadd.f32 0.0, %v407
        %v409 = vpop.f32.mrb[0].mxu0
        %410 = vmatprep.mubr.bf16.mxu0 0
        %411 = vmatmul.mubr.bf16.gmra.mrb[0].mxu0 %v316
        %v412 = vpop.f32.mrb[0].mxu0
        %v413 = vadd.f32 0.0, %v412
        %v414 = vpop.f32.mrb[0].mxu0
        %v415 = vpop.f32.mrb[0].mxu0
        %v416 = vadd.f32 0.0, %v415
        %v417 = vpop.f32.mrb[0].mxu0
        %418 = vdwg.mxu0
        %v419 = vlaneseq
        %v420 = vshrl.u32 %v419, 7
        %v421 = vadd.s32 %v420, 8
        %v422 = vadd.s32 %v420, 16
        %v423 = vadd.s32 %v420, 24
        %v424 = vadd.s32 %v420, 32
        %v425 = vadd.s32 %v420, 40
        %v426 = vadd.s32 %v420, 48
        %v427 = vadd.s32 %v420, 56
        %v428 = vadd.s32 %v420, 64
        %v429 = vadd.s32 %v420, 72
        %v430 = vadd.s32 %v420, 80
        %v431 = vadd.s32 %v420, 88
        %v432 = vadd.s32 %v420, 96
        %v433 = vadd.s32 %v420, 104
        %v434 = vadd.s32 %v420, 112
        %v435 = vadd.s32 %v420, 120
        %v436 = vand.u32 %v420, 15
        %v437 = vand.u32 %v421, 15
        %v438 = vand.u32 %v422, 15
        %v439 = vand.u32 %v423, 15
        %v440 = vand.u32 %v424, 15
        %v441 = vand.u32 %v425, 15
        %v442 = vand.u32 %v426, 15
        %v443 = vand.u32 %v427, 15
        %v444 = vand.u32 %v428, 15
        %v445 = vand.u32 %v429, 15
        %v446 = vand.u32 %v430, 15
        %v447 = vand.u32 %v431, 15
        %v448 = vand.u32 %v432, 15
        %v449 = vand.u32 %v433, 15
        %v450 = vand.u32 %v434, 15
        %v451 = vand.u32 %v435, 15
        %v452 = vcvt.s32.f32 %v436
        %v453 = vcvt.s32.f32 %v437
        %v454 = vcvt.s32.f32 %v438
        %v455 = vcvt.s32.f32 %v439
        %v456 = vcvt.s32.f32 %v440
        %v457 = vcvt.s32.f32 %v441
        %v458 = vcvt.s32.f32 %v442
        %v459 = vcvt.s32.f32 %v443
        %v460 = vcvt.s32.f32 %v444
        %v461 = vcvt.s32.f32 %v445
        %v462 = vcvt.s32.f32 %v446
        %v463 = vcvt.s32.f32 %v447
        %v464 = vcvt.s32.f32 %v448
        %v465 = vcvt.s32.f32 %v449
        %v466 = vcvt.s32.f32 %v450
        %v467 = vcvt.s32.f32 %v451
        %vm468 = vcmp.eq.f32.partialorder %v357, %v452
        %vm469 = vcmp.eq.f32.partialorder %v360, %v453
        %vm470 = vcmp.eq.f32.partialorder %v365, %v454
        %vm471 = vcmp.eq.f32.partialorder %v368, %v455
        %vm472 = vcmp.eq.f32.partialorder %v373, %v456
        %vm473 = vcmp.eq.f32.partialorder %v376, %v457
        %vm474 = vcmp.eq.f32.partialorder %v381, %v458
        %vm475 = vcmp.eq.f32.partialorder %v384, %v459
        %vm476 = vcmp.eq.f32.partialorder %v389, %v460
        %vm477 = vcmp.eq.f32.partialorder %v392, %v461
        %vm478 = vcmp.eq.f32.partialorder %v397, %v462
        %vm479 = vcmp.eq.f32.partialorder %v400, %v463
        %vm480 = vcmp.eq.f32.partialorder %v405, %v464
        %vm481 = vcmp.eq.f32.partialorder %v408, %v465
        %vm482 = vcmp.eq.f32.partialorder %v413, %v466
        %vm483 = vcmp.eq.f32.partialorder %v416, %v467
        %v484 = vsel %vm468, 1.0, 0.0
        %v485 = vsel %vm469, 1.0, 0.0
        %v486 = vsel %vm470, 1.0, 0.0
        %v487 = vsel %vm471, 1.0, 0.0
        %v488 = vsel %vm472, 1.0, 0.0
        %v489 = vsel %vm473, 1.0, 0.0
        %v490 = vsel %vm474, 1.0, 0.0
        %v491 = vsel %vm475, 1.0, 0.0
        %v492 = vsel %vm476, 1.0, 0.0
        %v493 = vsel %vm477, 1.0, 0.0
        %v494 = vsel %vm478, 1.0, 0.0
        %v495 = vsel %vm479, 1.0, 0.0
        %v496 = vsel %vm480, 1.0, 0.0
        %v497 = vsel %vm481, 1.0, 0.0
        %v498 = vsel %vm482, 1.0, 0.0
        %v499 = vsel %vm483, 1.0, 0.0
        %v500 = vpack.c.bf16 %v485, %v484
        %v501 = vpack.c.bf16 %v487, %v486
        %v502 = vpack.c.bf16 %v489, %v488
        %v503 = vpack.c.bf16 %v491, %v490
        %v504 = vpack.c.bf16 %v493, %v492
        %v505 = vpack.c.bf16 %v495, %v494
        %v506 = vpack.c.bf16 %v497, %v496
        %v507 = vpack.c.bf16 %v499, %v498
        %v508 = vld [vmem:[%s2] sm:$0xf]
        %v509 = vld [vmem:[%s2 + $0x4] sm:$0xf]
        %v510 = vld [vmem:[%s2 + $0x8] sm:$0xf]
        %v511 = vld [vmem:[%s2 + $0xc] sm:$0xf]
        %v512 = vld [vmem:[%s2 + $0x10] sm:$0xf]
        %v513 = vld [vmem:[%s2 + $0x14] sm:$0xf]
        %v514 = vld [vmem:[%s2 + $0x18] sm:$0xf]
        %v515 = vld [vmem:[%s2 + $0x1c] sm:$0xf]
        %v516 = vld [vmem:[%s2 + $0x20] sm:$0xf]
        %v517 = vld [vmem:[%s2 + $0x24] sm:$0xf]
        %v518 = vld [vmem:[%s2 + $0x28] sm:$0xf]
        %v519 = vld [vmem:[%s2 + $0x2c] sm:$0xf]
        %v520 = vld [vmem:[%s2 + $0x30] sm:$0xf]
        %v521 = vld [vmem:[%s2 + $0x34] sm:$0xf]
        %v522 = vld [vmem:[%s2 + $0x38] sm:$0xf]
        %v523 = vld [vmem:[%s2 + $0x3c] sm:$0xf]
        %v524 = vld [vmem:[%s2 + $0x40] sm:$0xf]
        %v525 = vld [vmem:[%s2 + $0x44] sm:$0xf]
        %v526 = vld [vmem:[%s2 + $0x48] sm:$0xf]
        %v527 = vld [vmem:[%s2 + $0x4c] sm:$0xf]
        %v528 = vld [vmem:[%s2 + $0x50] sm:$0xf]
        %v529 = vld [vmem:[%s2 + $0x54] sm:$0xf]
        %v530 = vld [vmem:[%s2 + $0x58] sm:$0xf]
        %v531 = vld [vmem:[%s2 + $0x5c] sm:$0xf]
        %v532 = vld [vmem:[%s2 + $0x60] sm:$0xf]
        %v533 = vld [vmem:[%s2 + $0x64] sm:$0xf]
        %v534 = vld [vmem:[%s2 + $0x68] sm:$0xf]
        %v535 = vld [vmem:[%s2 + $0x6c] sm:$0xf]
        %v536 = vld [vmem:[%s2 + $0x70] sm:$0xf]
        %v537 = vld [vmem:[%s2 + $0x74] sm:$0xf]
        %v538 = vld [vmem:[%s2 + $0x78] sm:$0xf]
        %v539 = vld [vmem:[%s2 + $0x7c] sm:$0xf]
        %v572 = vunpack.c.l.b16 %v508
        %v573 = vunpack.c.l.b16 %v509
        %v574 = vunpack.c.l.b16 %v510
        %v575 = vunpack.c.l.b16 %v511
        %v576 = vunpack.c.l.b16 %v512
        %v577 = vunpack.c.l.b16 %v513
        %v578 = vunpack.c.l.b16 %v514
        %v579 = vunpack.c.l.b16 %v515
        %v580 = vunpack.c.l.b16 %v516
        %v581 = vunpack.c.l.b16 %v517
        %v582 = vunpack.c.l.b16 %v518
        %v583 = vunpack.c.l.b16 %v519
        %v584 = vunpack.c.l.b16 %v520
        %v585 = vunpack.c.l.b16 %v521
        %v586 = vunpack.c.l.b16 %v522
        %v587 = vunpack.c.l.b16 %v523
        %v588 = vunpack.c.l.b16 %v524
        %v589 = vunpack.c.l.b16 %v525
        %v590 = vunpack.c.l.b16 %v526
        %v591 = vunpack.c.l.b16 %v527
        %v592 = vunpack.c.l.b16 %v528
        %v593 = vunpack.c.l.b16 %v529
        %v594 = vunpack.c.l.b16 %v530
        %v595 = vunpack.c.l.b16 %v531
        %v596 = vunpack.c.l.b16 %v532
        %v597 = vunpack.c.l.b16 %v533
        %v598 = vunpack.c.l.b16 %v534
        %v599 = vunpack.c.l.b16 %v535
        %v600 = vunpack.c.l.b16 %v536
        %v601 = vunpack.c.l.b16 %v537
        %v602 = vunpack.c.l.b16 %v538
        %v603 = vunpack.c.l.b16 %v539
        %v604 = vpack.c.b16 %v573, %v572
        %v605 = vpack.c.b16 %v575, %v574
        %v606 = vpack.c.b16 %v577, %v576
        %v607 = vpack.c.b16 %v579, %v578
        %v608 = vpack.c.b16 %v581, %v580
        %v609 = vpack.c.b16 %v583, %v582
        %v610 = vpack.c.b16 %v585, %v584
        %v611 = vpack.c.b16 %v587, %v586
        %v612 = vpack.c.b16 %v589, %v588
        %v613 = vpack.c.b16 %v591, %v590
        %v614 = vpack.c.b16 %v593, %v592
        %v615 = vpack.c.b16 %v595, %v594
        %v616 = vpack.c.b16 %v597, %v596
        %v617 = vpack.c.b16 %v599, %v598
        %v618 = vpack.c.b16 %v601, %v600
        %v619 = vpack.c.b16 %v603, %v602
        %636 = vmatprep.subr.bf16.mxu0 0
        %637 = vmatpush1.bf16.msra.mxu0 %v500
        %638 = vmatprep.subr.bf16.mxu0 0
        %639 = vmatpush1.bf16.msra.mxu0 %v501
        %640 = vmatprep.subr.bf16.mxu0 0
        %641 = vmatpush1.bf16.msra.mxu0 %v502
        %642 = vmatprep.subr.bf16.mxu0 0
        %643 = vmatpush1.bf16.msra.mxu0 %v503
        %644 = vmatprep.subr.bf16.mxu0 0
        %645 = vmatpush1.bf16.msra.mxu0 %v504
        %646 = vmatprep.subr.bf16.mxu0 0
        %647 = vmatpush1.bf16.msra.mxu0 %v505
        %648 = vmatprep.subr.bf16.mxu0 0
        %649 = vmatpush1.bf16.msra.mxu0 %v506
        %650 = vmatprep.subr.bf16.mxu0 0
        %651 = vmatpush1.bf16.msra.mxu0 %v507
        %652 = vmatprep.subr.bf16.mxu0 0
        %653 = vmatpush1.bf16.msra.mxu0 0
        %654 = vmatprep.subr.bf16.mxu0 0
        %655 = vmatpush1.bf16.msra.mxu0 0
        %656 = vmatprep.subr.bf16.mxu0 0
        %657 = vmatpush1.bf16.msra.mxu0 0
        %658 = vmatprep.subr.bf16.mxu0 0
        %659 = vmatpush1.bf16.msra.mxu0 0
        %660 = vmatprep.subr.bf16.mxu0 0
        %661 = vmatpush1.bf16.msra.mxu0 0
        %662 = vmatprep.subr.bf16.mxu0 0
        %663 = vmatpush1.bf16.msra.mxu0 0
        %664 = vmatprep.subr.bf16.mxu0 0
        %665 = vmatpush1.bf16.msra.mxu0 0
        %666 = vmatprep.subr.bf16.mxu0 0
        %667 = vmatpush1.bf16.msra.mxu0 0
        %668 = vmatprep.mubr.bf16.mxu0 0
        %669 = vmatmul.mubr.bf16.gmra.mrb[0].mxu0 %v604
        %v670 = vpop.f32.mrb[0].mxu0
        %v671 = vadd.f32 0.0, %v670
        %v672 = vpop.f32.mrb[0].mxu0
        %v673 = vpop.f32.mrb[0].mxu0
        %v674 = vadd.f32 0.0, %v673
        %v675 = vpop.f32.mrb[0].mxu0
        %676 = vmatprep.mubr.bf16.mxu0 0
        %677 = vmatmul.mubr.bf16.gmra.mrb[0].mxu0 %v605
        %v678 = vpop.f32.mrb[0].mxu0
        %v679 = vadd.f32 0.0, %v678
        %v680 = vpop.f32.mrb[0].mxu0
        %v681 = vpop.f32.mrb[0].mxu0
        %v682 = vadd.f32 0.0, %v681
        %v683 = vpop.f32.mrb[0].mxu0
        %684 = vmatprep.mubr.bf16.mxu0 0
        %685 = vmatmul.mubr.bf16.gmra.mrb[0].mxu0 %v606
        %v686 = vpop.f32.mrb[0].mxu0
        %v687 = vadd.f32 0.0, %v686
        %v688 = vpop.f32.mrb[0].mxu0
        %v689 = vpop.f32.mrb[0].mxu0
        %v690 = vadd.f32 0.0, %v689
        %v691 = vpop.f32.mrb[0].mxu0
        %692 = vmatprep.mubr.bf16.mxu0 0
        %693 = vmatmul.mubr.bf16.gmra.mrb[0].mxu0 %v607
        %v694 = vpop.f32.mrb[0].mxu0
        %v695 = vadd.f32 0.0, %v694
        %v696 = vpop.f32.mrb[0].mxu0
        %v697 = vpop.f32.mrb[0].mxu0
        %v698 = vadd.f32 0.0, %v697
        %v699 = vpop.f32.mrb[0].mxu0
        %700 = vmatprep.mubr.bf16.mxu0 0
        %701 = vmatmul.mubr.bf16.gmra.mrb[0].mxu0 %v608
        %v702 = vpop.f32.mrb[0].mxu0
        %v703 = vadd.f32 0.0, %v702
        %v704 = vpop.f32.mrb[0].mxu0
        %v705 = vpop.f32.mrb[0].mxu0
        %v706 = vadd.f32 0.0, %v705
        %v707 = vpop.f32.mrb[0].mxu0
        %708 = vmatprep.mubr.bf16.mxu0 0
        %709 = vmatmul.mubr.bf16.gmra.mrb[0].mxu0 %v609
        %v710 = vpop.f32.mrb[0].mxu0
        %v711 = vadd.f32 0.0, %v710
        %v712 = vpop.f32.mrb[0].mxu0
        %v713 = vpop.f32.mrb[0].mxu0
        %v714 = vadd.f32 0.0, %v713
        %v715 = vpop.f32.mrb[0].mxu0
        %716 = vmatprep.mubr.bf16.mxu0 0
        %717 = vmatmul.mubr.bf16.gmra.mrb[0].mxu0 %v610
        %v718 = vpop.f32.mrb[0].mxu0
        %v719 = vadd.f32 0.0, %v718
        %v720 = vpop.f32.mrb[0].mxu0
        %v721 = vpop.f32.mrb[0].mxu0
        %v722 = vadd.f32 0.0, %v721
        %v723 = vpop.f32.mrb[0].mxu0
        %724 = vmatprep.mubr.bf16.mxu0 0
        %725 = vmatmul.mubr.bf16.gmra.mrb[0].mxu0 %v611
        %v726 = vpop.f32.mrb[0].mxu0
        %v727 = vadd.f32 0.0, %v726
        %v728 = vpop.f32.mrb[0].mxu0
        %v729 = vpop.f32.mrb[0].mxu0
        %v730 = vadd.f32 0.0, %v729
        %v731 = vpop.f32.mrb[0].mxu0
        %732 = vmatprep.mubr.bf16.mxu0 0
        %733 = vmatmul.mubr.bf16.gmra.mrb[0].mxu0 %v612
        %v734 = vpop.f32.mrb[0].mxu0
        %v735 = vadd.f32 0.0, %v734
        %v736 = vpop.f32.mrb[0].mxu0
        %v737 = vpop.f32.mrb[0].mxu0
        %v738 = vadd.f32 0.0, %v737
        %v739 = vpop.f32.mrb[0].mxu0
        %740 = vmatprep.mubr.bf16.mxu0 0
        %741 = vmatmul.mubr.bf16.gmra.mrb[0].mxu0 %v613
        %v742 = vpop.f32.mrb[0].mxu0
        %v743 = vadd.f32 0.0, %v742
        %v744 = vpop.f32.mrb[0].mxu0
        %v745 = vpop.f32.mrb[0].mxu0
        %v746 = vadd.f32 0.0, %v745
        %v747 = vpop.f32.mrb[0].mxu0
        %748 = vmatprep.mubr.bf16.mxu0 0
        %749 = vmatmul.mubr.bf16.gmra.mrb[0].mxu0 %v614
        %v750 = vpop.f32.mrb[0].mxu0
        %v751 = vadd.f32 0.0, %v750
        %v752 = vpop.f32.mrb[0].mxu0
        %v753 = vpop.f32.mrb[0].mxu0
        %v754 = vadd.f32 0.0, %v753
        %v755 = vpop.f32.mrb[0].mxu0
        %756 = vmatprep.mubr.bf16.mxu0 0
        %757 = vmatmul.mubr.bf16.gmra.mrb[0].mxu0 %v615
        %v758 = vpop.f32.mrb[0].mxu0
        %v759 = vadd.f32 0.0, %v758
        %v760 = vpop.f32.mrb[0].mxu0
        %v761 = vpop.f32.mrb[0].mxu0
        %v762 = vadd.f32 0.0, %v761
        %v763 = vpop.f32.mrb[0].mxu0
        %764 = vmatprep.mubr.bf16.mxu0 0
        %765 = vmatmul.mubr.bf16.gmra.mrb[0].mxu0 %v616
        %v766 = vpop.f32.mrb[0].mxu0
        %v767 = vadd.f32 0.0, %v766
        %v768 = vpop.f32.mrb[0].mxu0
        %v769 = vpop.f32.mrb[0].mxu0
        %v770 = vadd.f32 0.0, %v769
        %v771 = vpop.f32.mrb[0].mxu0
        %772 = vmatprep.mubr.bf16.mxu0 0
        %773 = vmatmul.mubr.bf16.gmra.mrb[0].mxu0 %v617
        %v774 = vpop.f32.mrb[0].mxu0
        %v775 = vadd.f32 0.0, %v774
        %v776 = vpop.f32.mrb[0].mxu0
        %v777 = vpop.f32.mrb[0].mxu0
        %v778 = vadd.f32 0.0, %v777
        %v779 = vpop.f32.mrb[0].mxu0
        %780 = vmatprep.mubr.bf16.mxu0 0
        %781 = vmatmul.mubr.bf16.gmra.mrb[0].mxu0 %v618
        %v782 = vpop.f32.mrb[0].mxu0
        %v783 = vadd.f32 0.0, %v782
        %v784 = vpop.f32.mrb[0].mxu0
        %v785 = vpop.f32.mrb[0].mxu0
        %v786 = vadd.f32 0.0, %v785
        %v787 = vpop.f32.mrb[0].mxu0
        %788 = vmatprep.mubr.bf16.mxu0 0
        %789 = vmatmul.mubr.bf16.gmra.mrb[0].mxu0 %v619
        %v790 = vpop.f32.mrb[0].mxu0
        %v791 = vadd.f32 0.0, %v790
        %v792 = vpop.f32.mrb[0].mxu0
        %v793 = vpop.f32.mrb[0].mxu0
        %v794 = vadd.f32 0.0, %v793
        %v795 = vpop.f32.mrb[0].mxu0
        %796 = vdwg.mxu0
        %v797 = vadd.f32 %v671, %v735
        %v798 = vadd.f32 %v674, %v738
        %v799 = vadd.f32 %v679, %v743
        %v800 = vadd.f32 %v682, %v746
        %v801 = vadd.f32 %v687, %v751
        %v802 = vadd.f32 %v690, %v754
        %v803 = vadd.f32 %v695, %v759
        %v804 = vadd.f32 %v698, %v762
        %v805 = vadd.f32 %v703, %v767
        %v806 = vadd.f32 %v706, %v770
        %v807 = vadd.f32 %v711, %v775
        %v808 = vadd.f32 %v714, %v778
        %v809 = vadd.f32 %v719, %v783
        %v810 = vadd.f32 %v722, %v786
        %v811 = vadd.f32 %v727, %v791
        %v812 = vadd.f32 %v730, %v794
        %813 = vst [vmem:[%s181] sm:$0xff] %v797
        %814 = vst [vmem:[%s181 + $0x8] sm:$0xff] %v798
        %815 = vst [vmem:[%s181 + $0x10] sm:$0xff] %v799
        %816 = vst [vmem:[%s181 + $0x18] sm:$0xff] %v800
        %817 = vst [vmem:[%s181 + $0x20] sm:$0xff] %v801
        %818 = vst [vmem:[%s181 + $0x28] sm:$0xff] %v802
        %819 = vst [vmem:[%s181 + $0x30] sm:$0xff] %v803
        %820 = vst [vmem:[%s181 + $0x38] sm:$0xff] %v804
        %821 = vst [vmem:[%s181 + $0x40] sm:$0xff] %v805
        %822 = vst [vmem:[%s181 + $0x48] sm:$0xff] %v806
        %823 = vst [vmem:[%s181 + $0x50] sm:$0xff] %v807
        %824 = vst [vmem:[%s181 + $0x58] sm:$0xff] %v808
        %825 = vst [vmem:[%s181 + $0x60] sm:$0xff] %v809
        %826 = vst [vmem:[%s181 + $0x68] sm:$0xff] %v810
        %827 = vst [vmem:[%s181 + $0x70] sm:$0xff] %v811
        %828 = vst [vmem:[%s181 + $0x78] sm:$0xff] %v812
        %s829 = sand.u32 %s106, 1
        %s830 = sand.u32 %s106, 1
        %s831 = smul.addr %s830, 128
        %s832 = scalar_lea.vmem [#allocation2], %s831
        // Predicated region
        $region33: #{learned_class_vectors_forward.1} parent=31 // pred_check
          %p833 = pneg %p116
        $region34: #{learned_class_vectors_forward.1} parent=31 // pred_check_branch
          %835 = sbr.rel (%p833) target = $region36
        $region35: #{learned_class_vectors_forward.1} parent=31 // pred_region
          %s836 = smul.addr %s18, 32
          %s837 = sadd.s32 %s19, %s836
          %s838 = smul.addr %s837, 8
          %s839 = scalar_lea.vmem %s3, %s838
          // Predicated region
          $region37: #{learned_class_vectors_forward.1} parent=35 // pred_check
            _
          $region38: #{learned_class_vectors_forward.1} parent=35 // pred_check_branch
            %841 = sbr.rel (0) target = $region40
          $region39: #{learned_class_vectors_forward.1} parent=35 // pred_region
            // Predicated region
            $region41: #{learned_class_vectors_forward.1} parent=39 // pred_check
              _
            $region42: #{learned_class_vectors_forward.1} parent=39 // pred_check_branch
              %843 = sbr.rel (0) target = $region44
            $region43: #{learned_class_vectors_forward.1} parent=39 // pred_region
              // Predicated region
              $region56: #{learned_class_vectors_forward.1} parent=43 // pred_check
                _
              $region57: #{learned_class_vectors_forward.1} parent=43 // pred_check_branch
                %888 = sbr.rel (0) target = $region59
              $region58: #{learned_class_vectors_forward.1} parent=43 // pred_region
                loop: start=0, step=1, limit=1
                $region60: #{learned_class_vectors_forward.1} parent=58 // loop_pre_header
                  _
                $region61: #{learned_class_vectors_forward.1} parent=58 // loop_header
                  %s890 = sphi 0, %s894
                  %p891 = scmp.ge.s32.totalorder %s890, 1
                  %s895 = sphi %s832, %s832
                  %s896 = sphi %s839, %s839
                $region62: #{learned_class_vectors_forward.1} parent=58 // loop_header_branch
                  %893 = sbr.rel (%p891) target = $region66
                $region63: #{learned_class_vectors_forward.1} parent=58 // loop_body
                  %v897 = vld [vmem:[%s895] sm:$0xff]
                  %898 = vst [vmem:[%s896] sm:$0xff] %v897
                  %v899 = vld [vmem:[%s895 + $0x8] sm:$0xff]
                  %900 = vst [vmem:[%s896 + $0x10] sm:$0xff] %v899
                  %v901 = vld [vmem:[%s895 + $0x10] sm:$0xff]
                  %902 = vst [vmem:[%s896 + $0x20] sm:$0xff] %v901
                  %v903 = vld [vmem:[%s895 + $0x18] sm:$0xff]
                  %904 = vst [vmem:[%s896 + $0x30] sm:$0xff] %v903
                  %v905 = vld [vmem:[%s895 + $0x20] sm:$0xff]
                  %906 = vst [vmem:[%s896 + $0x40] sm:$0xff] %v905
                  %v907 = vld [vmem:[%s895 + $0x28] sm:$0xff]
                  %908 = vst [vmem:[%s896 + $0x50] sm:$0xff] %v907
                  %v909 = vld [vmem:[%s895 + $0x30] sm:$0xff]
                  %910 = vst [vmem:[%s896 + $0x60] sm:$0xff] %v909
                  %v911 = vld [vmem:[%s895 + $0x38] sm:$0xff]
                  %912 = vst [vmem:[%s896 + $0x70] sm:$0xff] %v911
                  %v913 = vld [vmem:[%s895 + $0x40] sm:$0xff]
                  %914 = vst [vmem:[%s896 + $0x80] sm:$0xff] %v913
                  %v915 = vld [vmem:[%s895 + $0x48] sm:$0xff]
                  %916 = vst [vmem:[%s896 + $0x90] sm:$0xff] %v915
                  %v917 = vld [vmem:[%s895 + $0x50] sm:$0xff]
                  %918 = vst [vmem:[%s896 + $0xa0] sm:$0xff] %v917
                  %v919 = vld [vmem:[%s895 + $0x58] sm:$0xff]
                  %920 = vst [vmem:[%s896 + $0xb0] sm:$0xff] %v919
                  %v921 = vld [vmem:[%s895 + $0x60] sm:$0xff]
                  %922 = vst [vmem:[%s896 + $0xc0] sm:$0xff] %v921
                  %v923 = vld [vmem:[%s895 + $0x68] sm:$0xff]
                  %924 = vst [vmem:[%s896 + $0xd0] sm:$0xff] %v923
                  %v925 = vld [vmem:[%s895 + $0x70] sm:$0xff]
                  %926 = vst [vmem:[%s896 + $0xe0] sm:$0xff] %v925
                  %v927 = vld [vmem:[%s895 + $0x78] sm:$0xff]
                  %928 = vst [vmem:[%s896 + $0xf0] sm:$0xff] %v927
                $region64: #{learned_class_vectors_forward.1} parent=58 // loop_footer
                  %s894 = sadd.s32 1, %s890
                $region65: #{learned_class_vectors_forward.1} parent=58 // loop_footer_branch
                  %889 = sbr.rel target = $region61
                $region66: #{learned_class_vectors_forward.1} parent=58 // loop_exit
                  _
              $region59: #{learned_class_vectors_forward.1} parent=43 // pred_fallthru
                _
              // Predicated region
              $region67: #{learned_class_vectors_forward.1} parent=43 // pred_check
                _
              $region68: #{learned_class_vectors_forward.1} parent=43 // pred_check_branch
                %930 = sbr.rel target = $region70
              $region69: #{learned_class_vectors_forward.1} parent=43 // pred_region
                _
              $region70: #{learned_class_vectors_forward.1} parent=43 // pred_fallthru
                _
            $region44: #{learned_class_vectors_forward.1} parent=39 // pred_fallthru
              _
            // Predicated region
            $region45: #{learned_class_vectors_forward.1} parent=39 // pred_check
              _
            $region46: #{learned_class_vectors_forward.1} parent=39 // pred_check_branch
              %845 = sbr.rel target = $region48
            $region47: #{learned_class_vectors_forward.1} parent=39 // pred_region
              loop: start=0, step=1, limit=1
              $region49: #{learned_class_vectors_forward.1} parent=47 // loop_pre_header
                _
              $region50: #{learned_class_vectors_forward.1} parent=47 // loop_header
                %s848 = sphi 0, %s852
                %p849 = scmp.ge.s32.totalorder %s848, 1
                %s853 = sphi %s832, %s832
                %s854 = sphi %s839, %s839
              $region51: #{learned_class_vectors_forward.1} parent=47 // loop_header_branch
                %851 = sbr.rel (%p849) target = $region55
              $region52: #{learned_class_vectors_forward.1} parent=47 // loop_body
                %v855 = vld [vmem:[%s853] sm:$0xff]
                %856 = vst [vmem:[%s854] sm:$0xff] %v855
                %v857 = vld [vmem:[%s853 + $0x8] sm:$0xff]
                %858 = vst [vmem:[%s854 + $0x10] sm:$0xff] %v857
                %v859 = vld [vmem:[%s853 + $0x10] sm:$0xff]
                %860 = vst [vmem:[%s854 + $0x20] sm:$0xff] %v859
                %v861 = vld [vmem:[%s853 + $0x18] sm:$0xff]
                %862 = vst [vmem:[%s854 + $0x30] sm:$0xff] %v861
                %v863 = vld [vmem:[%s853 + $0x20] sm:$0xff]
                %864 = vst [vmem:[%s854 + $0x40] sm:$0xff] %v863
                %v865 = vld [vmem:[%s853 + $0x28] sm:$0xff]
                %866 = vst [vmem:[%s854 + $0x50] sm:$0xff] %v865
                %v867 = vld [vmem:[%s853 + $0x30] sm:$0xff]
                %868 = vst [vmem:[%s854 + $0x60] sm:$0xff] %v867
                %v869 = vld [vmem:[%s853 + $0x38] sm:$0xff]
                %870 = vst [vmem:[%s854 + $0x70] sm:$0xff] %v869
                %v871 = vld [vmem:[%s853 + $0x40] sm:$0xff]
                %872 = vst [vmem:[%s854 + $0x80] sm:$0xff] %v871
                %v873 = vld [vmem:[%s853 + $0x48] sm:$0xff]
                %874 = vst [vmem:[%s854 + $0x90] sm:$0xff] %v873
                %v875 = vld [vmem:[%s853 + $0x50] sm:$0xff]
                %876 = vst [vmem:[%s854 + $0xa0] sm:$0xff] %v875
                %v877 = vld [vmem:[%s853 + $0x58] sm:$0xff]
                %878 = vst [vmem:[%s854 + $0xb0] sm:$0xff] %v877
                %v879 = vld [vmem:[%s853 + $0x60] sm:$0xff]
                %880 = vst [vmem:[%s854 + $0xc0] sm:$0xff] %v879
                %v881 = vld [vmem:[%s853 + $0x68] sm:$0xff]
                %882 = vst [vmem:[%s854 + $0xd0] sm:$0xff] %v881
                %v883 = vld [vmem:[%s853 + $0x70] sm:$0xff]
                %884 = vst [vmem:[%s854 + $0xe0] sm:$0xff] %v883
                %v885 = vld [vmem:[%s853 + $0x78] sm:$0xff]
                %886 = vst [vmem:[%s854 + $0xf0] sm:$0xff] %v885
              $region53: #{learned_class_vectors_forward.1} parent=47 // loop_footer
                %s852 = sadd.s32 1, %s848
              $region54: #{learned_class_vectors_forward.1} parent=47 // loop_footer_branch
                %847 = sbr.rel target = $region50
              $region55: #{learned_class_vectors_forward.1} parent=47 // loop_exit
                _
            $region48: #{learned_class_vectors_forward.1} parent=39 // pred_fallthru
              _
          $region40: #{learned_class_vectors_forward.1} parent=35 // pred_fallthru
            _
          %931 = vnop
        $region36: #{learned_class_vectors_forward.1} parent=31 // pred_fallthru
          _
      $region32: #{learned_class_vectors_forward.1} parent=5 // pred_fallthru
        _
      %p932 = scmp.le.s32.totalorder 2, %s9
      // Predicated region
      $region71: #{learned_class_vectors_forward.1} parent=5 // pred_check
        %p933 = pneg %p932
      $region72: #{learned_class_vectors_forward.1} parent=5 // pred_check_branch
        %935 = sbr.rel (%p933) target = $region74
      $region73: #{learned_class_vectors_forward.1} parent=5 // pred_region
        %s936 = ssub.s32 %s9, 2
        // Predicated region
        $region75: #{learned_class_vectors_forward.1} parent=73 // pred_check
          %p937 = pneg %p122
        $region76: #{learned_class_vectors_forward.1} parent=73 // pred_check_branch
          %939 = sbr.rel (%p937) target = $region78
        $region77: #{learned_class_vectors_forward.1} parent=73 // pred_region
          %s940 = sand.u32 %s107, 1
          %s941 = sand.u32 %s107, 1
          %s942 = smul.addr %s941, 128
          %s943 = scalar_lea.vmem [#allocation2], %s942
        $region78: #{learned_class_vectors_forward.1} parent=73 // pred_fallthru
          _
      $region74: #{learned_class_vectors_forward.1} parent=5 // pred_fallthru
        _
    $region6: #{learned_class_vectors_forward.1} parent=1 // loop_footer
      %s13 = sadd.s32 1, %s9
    $region7: #{learned_class_vectors_forward.1} parent=1 // loop_footer_branch
      %8 = sbr.rel target = $region3
    $region8: #{learned_class_vectors_forward.1} parent=1 // loop_exit
      _

</llo_original>
